<compile_context>
chip_gen: v7x
topology: tpu7x:2x2x1
jax: 0.10.0
libtpu: 0.0.40
codegen_flags: <defaults>
</compile_context>

<pallas_src>
import math

import jax
import jax.numpy as jnp
import numpy as np
from jax.experimental import pallas as pl
from jax.experimental.pallas import tpu as pltpu


# -----------------------------------------------------------------------------
# Single-pass kernel: one (Bt, C, H*W) slab -> sum over H*W, circular K-tap conv
# over channels, sigmoid gate (output scale folded in), one slab multiply, store.
# -----------------------------------------------------------------------------
def _eca_kernel(w_ref, scale_ref, x_ref, o_ref):
    x = x_ref[...]                                           # native dtype, read once
    # taps are pre-scaled by 1/(H*W), so a plain sum gives the (scaled) channel means
    sums = jnp.sum(x, axis=-1, dtype=jnp.float32)            # (Bt, C) f32
    C = sums.shape[-1]
    K = w_ref.shape[0]
    P = (K - 1) // 2
    # circular pad along channels, then K static-offset taps (no dense CxC circulant)
    padded = jnp.concatenate([sums[:, C - P:], sums, sums[:, :P]], axis=1)  # (Bt, C+2P)
    conv = w_ref[0] * padded[:, 0:C]
    for k in range(1, K):
        conv = conv + w_ref[k] * padded[:, k:k + C]
    gate = jax.nn.sigmoid(conv) * scale_ref[0]               # f32; output scale folded in
    # gate stays f32; promote per-vreg, cast only at the store
    o_ref[...] = (x * gate[:, :, None]).astype(o_ref.dtype)


# -----------------------------------------------------------------------------
# Fallback kernels (large single-batch slabs): HW-tiled sum reduction + HW-tiled
# elementwise scale.  ~1.5x HBM traffic of the single-pass path but always fits.
# -----------------------------------------------------------------------------
def _make_sum_kernel(hw_total, hw_tile):
    needs_mask = (hw_total % hw_tile) != 0

    def _sum_kernel(x_ref, s_ref):
        h = pl.program_id(1)

        @pl.when(h == 0)
        def _():
            s_ref[...] = jnp.zeros_like(s_ref)

        x = x_ref[...]                                        # (1, C, hw_tile)
        if needs_mask:                                        # mask the ragged last tile
            lane = jax.lax.broadcasted_iota(jnp.int32, x.shape, 2) + h * hw_tile
            x = jnp.where(lane < hw_total, x, jnp.zeros_like(x))
        s_ref[...] += jnp.sum(x, axis=-1, keepdims=True, dtype=jnp.float32)

    return _sum_kernel


def _scale_kernel(gate_ref, x_ref, o_ref):
    o_ref[...] = (x_ref[...] * gate_ref[...]).astype(o_ref.dtype)


# -----------------------------------------------------------------------------
# Host-side sizing helpers
# -----------------------------------------------------------------------------
def _tpu_vmem_and_cores():
    try:
        vmem = int(pltpu.get_tpu_info().vmem_capacity_bytes)
    except Exception:
        vmem = 64 * 1024 * 1024            # conservative (v7x-sized) default
    num_cores = 2 if vmem <= 64 * 1024 * 1024 else 1
    return vmem, num_cores


def _budgets():
    vmem, num_cores = _tpu_vmem_and_cores()
    if vmem > 96 * 1024 * 1024:            # v5e / v6e: 128 MiB VMEM, single TensorCore
        target_block = 12 * 1024 * 1024
        limit_cap = 100 * 1024 * 1024
    else:                                  # v7x: 64 MiB VMEM per TensorCore, 2 cores
        target_block = 6 * 1024 * 1024
        limit_cap = 52 * 1024 * 1024
    slack = 2 * 1024 * 1024
    block_budget = min(target_block, (limit_cap - slack) // 4)   # 2x(in+out) <= cap
    return block_budget, limit_cap, slack, num_cores


def _pick_batch_tile(B, per_batch_bytes, block_budget_bytes, num_cores):
    bt = max(1, min(B, block_budget_bytes // per_batch_bytes))
    if num_cores > 1 and B > 1:
        # multi-core chips: prefer >= 2 grid steps per core for pipelining, but never
        # shrink a block below the ~4 MiB HBM-roofline plateau.
        min_steps = 2 * num_cores
        bt_for_steps = max(1, B // min_steps)
        bt_floor = max(1, -((-4 * 1024 * 1024) // per_batch_bytes))
        bt = min(bt, max(bt_for_steps, bt_floor))
    return int(bt)


def _gate_from_sums(sums, w_taps, scale_arr):
    """(B, C) raw sums (+ taps pre-scaled by 1/(H*W)) -> circular conv -> sigmoid*scale."""
    _, C = sums.shape
    K = w_taps.shape[0]
    P = (K - 1) // 2
    padded = jnp.concatenate([sums[:, C - P:], sums, sums[:, :P]], axis=1)
    conv = w_taps[0] * padded[:, 0:C]
    for k in range(1, K):
        conv = conv + w_taps[k] * padded[:, k:k + C]
    return jax.nn.sigmoid(conv) * scale_arr[0]


def _tiled_path(x3, w_taps, scale_arr, block_budget, limit_cap):
    B, C, HW = x3.shape
    itemsize = x3.dtype.itemsize
    max_lanes = max(1, block_budget // max(1, C * itemsize))
    if HW <= 128 or max_lanes >= HW:
        hw_tile = HW
    else:
        hw_tile = max(128, (max_lanes // 128) * 128)
    # TODO(synk): if C alone is so large that a (1, C, 128) block exceeds VMEM, also tile C.
    n_hw = pl.cdiv(HW, hw_tile)
    block_bytes = C * hw_tile * itemsize

    sum_vmem = int(min(limit_cap, max(2 * block_bytes + (1 << 20), 8 * 1024 * 1024)))
    sums3 = pl.pallas_call(
        _make_sum_kernel(HW, hw_tile),
        out_shape=jax.ShapeDtypeStruct((B, C, 1), jnp.float32),
        grid=(B, n_hw),
        in_specs=[pl.BlockSpec((1, C, hw_tile), lambda b, h: (b, 0, h))],
        out_specs=pl.BlockSpec((1, C, 1), lambda b, h: (b, 0, 0)),
        compiler_params=pltpu.CompilerParams(
            dimension_semantics=("parallel", "arbitrary"),
            vmem_limit_bytes=sum_vmem),
        cost_estimate=pl.CostEstimate(
            flops=B * C * HW, transcendentals=0,
            bytes_accessed=B * C * HW * itemsize),
    )(x3)

    gate3 = _gate_from_sums(sums3[:, :, 0], w_taps, scale_arr)[:, :, None]   # (B, C, 1) f32

    scale_vmem = int(min(limit_cap, max(4 * block_bytes + (1 << 20), 8 * 1024 * 1024)))
    out3 = pl.pallas_call(
        _scale_kernel,
        out_shape=jax.ShapeDtypeStruct((B, C, HW), x3.dtype),
        grid=(B, n_hw),
        in_specs=[pl.BlockSpec((1, C, 1), lambda b, h: (b, 0, 0)),
                  pl.BlockSpec((1, C, hw_tile), lambda b, h: (b, 0, h))],
        out_specs=pl.BlockSpec((1, C, hw_tile), lambda b, h: (b, 0, h)),
        compiler_params=pltpu.CompilerParams(
            dimension_semantics=("parallel", "parallel"),
            vmem_limit_bytes=scale_vmem),
        cost_estimate=pl.CostEstimate(
            flops=B * C * HW, transcendentals=0,
            bytes_accessed=2 * B * C * HW * itemsize),
    )(gate3, x3)
    return out3


# -----------------------------------------------------------------------------
# Public wrapper
# -----------------------------------------------------------------------------
def circular_excite_2d(x, conv_weight, scale=None, *, max_block_bytes=None):
    """x: (B, C, H, W); conv_weight: (K,) Conv1d(1,1,K,bias=False) weights; scale: (1,) or None."""
    B, C, H, W = x.shape
    HW = H * W
    x3 = x.reshape(B, C, HW)
    itemsize = x.dtype.itemsize
    K = int(conv_weight.shape[0])

    # fold 1/(H*W) into the tap weights (the conv is linear) -> kernels only need sums
    w_taps = jnp.asarray(conv_weight, dtype=jnp.float32) / float(HW)
    if scale is None:
        scale_arr = jnp.ones((1,), dtype=jnp.float32)
    else:
        scale_arr = jnp.asarray(scale, dtype=jnp.float32).reshape(1)

    block_budget, limit_cap, slack, num_cores = _budgets()
    if max_block_bytes is not None:
        block_budget = max(1, min(block_budget, int(max_block_bytes)))

    per_batch = C * HW * itemsize
    if per_batch > block_budget:
        # one batch slab no longer fits a VMEM block -> HW-tiled two-pass fallback
        out3 = _tiled_path(x3, w_taps, scale_arr, block_budget, limit_cap)
        return out3.reshape(B, C, H, W)

    bt = _pick_batch_tile(B, per_batch, block_budget, num_cores)
    block_bytes = bt * per_batch
    vmem_limit = int(min(limit_cap, max(4 * block_bytes + slack, 8 * 1024 * 1024)))

    out3 = pl.pallas_call(
        _eca_kernel,
        out_shape=jax.ShapeDtypeStruct((B, C, HW), x.dtype),
        grid=(pl.cdiv(B, bt),),
        in_specs=[
            pl.BlockSpec(memory_space=pltpu.MemorySpace.SMEM),     # (K,) tap weights
            pl.BlockSpec(memory_space=pltpu.MemorySpace.SMEM),     # (1,) output scale
            pl.BlockSpec((bt, C, HW), lambda b: (b, 0, 0)),        # x slab per grid step
        ],
        out_specs=pl.BlockSpec((bt, C, HW), lambda b: (b, 0, 0)),
        compiler_params=pltpu.CompilerParams(
            dimension_semantics=("parallel",),
            vmem_limit_bytes=vmem_limit),
        cost_estimate=pl.CostEstimate(
            flops=2 * B * C * HW + 2 * B * C * K,
            transcendentals=B * C,
            bytes_accessed=2 * B * C * HW * itemsize),
    )(w_taps, scale_arr, x3)
    return out3.reshape(B, C, H, W)


# -----------------------------------------------------------------------------
# Pure-JAX reference mirroring the PyTorch forward
# -----------------------------------------------------------------------------
def _reference(x, conv_weight, scale, padding):
    B, C, H, W = x.shape
    K = conv_weight.shape[0]
    means = jnp.mean(x.astype(jnp.float32), axis=(-2, -1))                  # (B, C)
    padded = jnp.concatenate(
        [means[:, C - padding:], means, means[:, :padding]], axis=1)        # circular pad
    windows = jnp.stack([padded[:, c:c + K] for c in range(C)], axis=1)     # (B, C, K)
    conv = jnp.einsum("bck,k->bc", windows, conv_weight.astype(jnp.float32))
    gate = jax.nn.sigmoid(conv)
    out = x * gate[:, :, None, None]
    if scale is not None:
        out = out * scale[0]
    return out


if __name__ == "__main__":
    gamma, beta = 2, 1

    def make_inputs(B, C, H, W, seed=0):
        # kernel_size / padding exactly as in the module __init__
        kernel_size = int(abs(math.log2(C) + beta) / gamma)
        kernel_size = max(kernel_size if kernel_size % 2 else kernel_size + 1, 3)
        padding = (kernel_size - 1) // 2
        key = jax.random.PRNGKey(seed)
        kx, kw = jax.random.split(key)
        x = jax.random.normal(kx, (B, C, H, W), dtype=jnp.float32)
        # Conv1d(1,1,K,bias=False) default init: U(-1/sqrt(K), 1/sqrt(K))
        bound = 1.0 / math.sqrt(kernel_size)
        w = jax.random.uniform(kw, (kernel_size,), minval=-bound, maxval=bound,
                               dtype=jnp.float32)
        return x, w, padding

    # module default scale=0.0 would zero the output; use a nontrivial value
    scale = jnp.array([0.5], dtype=jnp.float32)

    # 1) single-pass (traffic-optimal) path
    x, w, padding = make_inputs(2, 4, 16, 16)
    out = jax.block_until_ready(circular_excite_2d(x, w, scale))
    ref = _reference(x, w, scale, padding)
    np.testing.assert_allclose(np.asarray(out), np.asarray(ref), rtol=1e-5, atol=1e-5)

    # 2) HW-tiled fallback path, forced via a tiny block budget; HW=324 exercises the
    #    128-lane tiling plus the masked ragged tail.
    x2, w2, padding2 = make_inputs(2, 4, 18, 18, seed=0)
    out2 = jax.block_until_ready(circular_excite_2d(x2, w2, scale, max_block_bytes=2048))
    ref2 = _reference(x2, w2, scale, padding2)
    np.testing.assert_allclose(np.asarray(out2), np.asarray(ref2), rtol=1e-5, atol=1e-5)

    print("KERNEL_OK")
</pallas_src>

<mosaic_0001>
module attributes {stable_mosaic.version = 11 : i64} {
  func.func @_eca_kernel(%arg0: i32, %arg1: memref<3xf32, #tpu.memory_space<smem>>, %arg2: memref<1xf32, #tpu.memory_space<smem>>, %arg3: memref<2x4x256xf32, #tpu.memory_space<vmem>>, %arg4: memref<2x4x256xf32, #tpu.memory_space<vmem>>) attributes {dimension_semantics = [#tpu.dimension_semantics<parallel>], iteration_bounds = array<i64: 1>, scalar_prefetch = 0 : i64, scratch_operands = 0 : i64, tpu.core_type = #tpu.core_type<tc>, window_params = [{transform_indices = @transform_0, window_bounds = array<i64: 3>}, {transform_indices = @transform_1, window_bounds = array<i64: 1>}, {transform_indices = @transform_2, window_bounds = array<i64: 2, 4, 256>}, {transform_indices = @transform_3, window_bounds = array<i64: 2, 4, 256>}]} {
    %c0 = arith.constant 0 : index
    %c0_0 = arith.constant 0 : index
    %c0_1 = arith.constant 0 : index
    %0 = vector.load %arg3[%c0, %c0_0, %c0_1] : memref<2x4x256xf32, #tpu.memory_space<vmem>>, vector<2x4x256xf32>
    %cst = arith.constant dense<0.000000e+00> : vector<2x4xf32>
    %1 = vector.multi_reduction <add>, %0, %cst [2] : vector<2x4x256xf32> to vector<2x4xf32>
    %2 = vector.extract_strided_slice %1 {offsets = [0, 3], sizes = [2, 1], strides = [1, 1]} : vector<2x4xf32> to vector<2x1xf32>
    %3 = vector.extract_strided_slice %1 {offsets = [0, 0], sizes = [2, 1], strides = [1, 1]} : vector<2x4xf32> to vector<2x1xf32>
    %4 = tpu.concatenate %2, %1, %3 in 1 : vector<2x1xf32>, vector<2x4xf32>, vector<2x1xf32> -> vector<2x6xf32>
    %c0_2 = arith.constant 0 : index
    %5 = memref.load %arg1[%c0_2] : memref<3xf32, #tpu.memory_space<smem>>
    %6 = vector.extract_strided_slice %4 {offsets = [0, 0], sizes = [2, 4], strides = [1, 1]} : vector<2x6xf32> to vector<2x4xf32>
    %7 = vector.broadcast %5 : f32 to vector<2x4xf32>
    %8 = arith.mulf %7, %6 : vector<2x4xf32>
    %c1 = arith.constant 1 : index
    %9 = memref.load %arg1[%c1] : memref<3xf32, #tpu.memory_space<smem>>
    %10 = vector.extract_strided_slice %4 {offsets = [0, 1], sizes = [2, 4], strides = [1, 1]} : vector<2x6xf32> to vector<2x4xf32>
    %11 = vector.broadcast %9 : f32 to vector<2x4xf32>
    %12 = arith.mulf %11, %10 : vector<2x4xf32>
    %13 = arith.addf %8, %12 : vector<2x4xf32>
    %c2 = arith.constant 2 : index
    %14 = memref.load %arg1[%c2] : memref<3xf32, #tpu.memory_space<smem>>
    %15 = vector.extract_strided_slice %4 {offsets = [0, 2], sizes = [2, 4], strides = [1, 1]} : vector<2x6xf32> to vector<2x4xf32>
    %16 = vector.broadcast %14 : f32 to vector<2x4xf32>
    %17 = arith.mulf %16, %15 : vector<2x4xf32>
    %18 = arith.addf %13, %17 : vector<2x4xf32>
    %19 = arith.negf %18 : vector<2x4xf32>
    %20 = math.exp %19 : vector<2x4xf32>
    %cst_3 = arith.constant 1.000000e+00 : f32
    %21 = vector.broadcast %cst_3 : f32 to vector<2x4xf32>
    %22 = arith.addf %21, %20 : vector<2x4xf32>
    %23 = arith.divf %21, %22 : vector<2x4xf32>
    %c0_4 = arith.constant 0 : index
    %24 = memref.load %arg2[%c0_4] : memref<1xf32, #tpu.memory_space<smem>>
    %25 = vector.broadcast %24 : f32 to vector<2x4xf32>
    %26 = arith.mulf %23, %25 : vector<2x4xf32>
    %27 = vector.shape_cast %26 : vector<2x4xf32> to vector<2x4x1xf32>
    %28 = vector.broadcast %27 : vector<2x4x1xf32> to vector<2x4x256xf32>
    %29 = arith.mulf %0, %28 : vector<2x4x256xf32>
    %c0_5 = arith.constant 0 : index
    %c0_6 = arith.constant 0 : index
    %c0_7 = arith.constant 0 : index
    %30 = vector.load %arg4[%c0_5, %c0_6, %c0_7] : memref<2x4x256xf32, #tpu.memory_space<vmem>>, vector<2x4x256xf32>
    tpu.vector_store %arg4[%c0_5, %c0_6, %c0_7], %29 {strides = array<i32>} : memref<2x4x256xf32, #tpu.memory_space<vmem>>, vector<2x4x256xf32>,
    return
  }
  func.func @transform_0(%arg0: i32) -> i32 {
    %c0_i32 = arith.constant 0 : i32
    %c0_i32_0 = arith.constant 0 : i32
    return %c0_i32 : i32
  }
  func.func @transform_1(%arg0: i32) -> i32 {
    %c0_i32 = arith.constant 0 : i32
    %c0_i32_0 = arith.constant 0 : i32
    return %c0_i32 : i32
  }
  func.func @transform_2(%arg0: i32) -> (i32, i32, i32) {
    %c0_i32 = arith.constant 0 : i32
    %c0_i32_0 = arith.constant 0 : i32
    %c0_i32_1 = arith.constant 0 : i32
    return %arg0, %c0_i32, %c0_i32_0 : i32, i32, i32
  }
  func.func @transform_3(%arg0: i32) -> (i32, i32, i32) {
    %c0_i32 = arith.constant 0 : i32
    %c0_i32_0 = arith.constant 0 : i32
    %c0_i32_1 = arith.constant 0 : i32
    return %arg0, %c0_i32, %c0_i32_0 : i32, i32, i32
  }
}

</mosaic_0001>

<llo_original>
// kernel: tpu_custom_call.1
$region0: #{tpu_custom_call.1}
  #allocation0 [shape = 'u32[]', space=smem, size = 0x4, offset = 0x4, fixed_abs, tag = 'smem constant byte address 0x4 - core index']
  #allocation1 [shape = 'u32[144,128]{1,0:T(1,128)}', space=vmem, size = 0x12000, scoped, tag = 'internal scratch']
  #allocation2 [shape = 'f32[1]{0:T(128)S(6)}', space=smem, size = 0x200, scoped, tag = 'scoped memory for tpu_custom_call.1']
  %s0 = inlined_call_operand.vmem [shape: f32[3], index: 0, kind: input, shape index: {}]
  %s1 = inlined_call_operand.<no memory space> [shape: f32[1], index: 1, kind: input, shape index: {}]
  %s2 = inlined_call_operand.hbm [shape: f32[2,4,256], index: 2, kind: input, shape index: {}]
  %s3 = inlined_call_operand.hbm [shape: f32[2,4,256], index: 3, kind: output, shape index: {}]
  %s4 = sld [smem:[#allocation0]]
  $region30: #{tpu_custom_call.1} parent=0
    _
  %s6 = ssub.s32 1, %s4
  %s7 = scalar_select 0, %s6, %s4
  %8 = sst [smem:[#allocation2]] %s1
  $region1: #{tpu_custom_call.1} parent=0
    #allocation3 [shape = 'u8[512]{0}', space=smem, size = 0x200, scoped, tag = 'input window, operand 0, single buffered']
    #allocation4 [shape = 's32[1]{0}', space=sflag, size = 0x4, scoped, tag = 'scoped memory for tpu_custom_call.1']
    #allocation5 [shape = 's32[1]{0}', space=sflag, size = 0x4, scoped, tag = 'scoped memory for tpu_custom_call.1']
    #allocation6 [shape = 's32[1]{0}', space=sflag, size = 0x4, scoped, tag = 'scoped memory for tpu_custom_call.1']
    #allocation7 [shape = 'u8[8192]{0}', space=vmem, size = 0x2000, scoped, tag = 'input window, operand 2, single buffered']
    #allocation8 [shape = 'u8[8192]{0}', space=vmem, size = 0x2000, scoped, tag = 'output window, operand 0, single buffered']
    %9 = vsyncpa [#allocation6], 0
    %10 = vsyncpa [#allocation4], 0
    %11 = vsyncpa [#allocation5], 0
    // Predicated region
    $region2: #{tpu_custom_call.1} parent=1 // pred_check
      _
    $region3: #{tpu_custom_call.1} parent=1 // pred_check_branch
      %13 = sbr.rel (0) target = $region5
    $region4: #{tpu_custom_call.1} parent=1 // pred_region
      %s15 = ssub.s32 16, 16
      %16 = vsyncadd [#allocation6], %s15
      %s18 = sshll.u32 %s0, 4
      %s19 = int_to_ptr.vmem [resolvable:$true] %s18
      %21 = dma.vmem_to_smem %s19, 16, [#allocation3], [#allocation6]
    $region5: #{tpu_custom_call.1} parent=1 // pred_fallthru
      _
    // Predicated region
    $region6: #{tpu_custom_call.1} parent=1 // pred_check
      _
    $region7: #{tpu_custom_call.1} parent=1 // pred_check_branch
      %23 = sbr.rel (0) target = $region9
    $region8: #{tpu_custom_call.1} parent=1 // pred_region
      _
    $region9: #{tpu_custom_call.1} parent=1 // pred_fallthru
      _
    // Predicated region
    $region10: #{tpu_custom_call.1} parent=1 // pred_check
      _
    $region11: #{tpu_custom_call.1} parent=1 // pred_check_branch
      %25 = sbr.rel (0) target = $region13
    $region12: #{tpu_custom_call.1} parent=1 // pred_region
      %s27 = ssub.s32 256, 256
      %28 = vsyncadd [#allocation4], %s27
      %s29 = sshll.u32 [#allocation7], 4
      %s30 = int_to_ptr.vmem [resolvable:$true] %s29
      %35 = dma.hbm_to_vmem [thread:$0]  %s2, 256, %s30, [#allocation4], 128, 128, 8
    $region13: #{tpu_custom_call.1} parent=1 // pred_fallthru
      _
    // Predicated region
    $region14: #{tpu_custom_call.1} parent=1 // pred_check
      _
    $region15: #{tpu_custom_call.1} parent=1 // pred_check_branch
      %37 = sbr.rel (0) target = $region17
    $region16: #{tpu_custom_call.1} parent=1 // pred_region
      %38 = dma.done [#allocation6], 16
    $region17: #{tpu_custom_call.1} parent=1 // pred_fallthru
      _
    // Predicated region
    $region18: #{tpu_custom_call.1} parent=1 // pred_check
      _
    $region19: #{tpu_custom_call.1} parent=1 // pred_check_branch
      %40 = sbr.rel (0) target = $region21
    $region20: #{tpu_custom_call.1} parent=1 // pred_region
      %41 = dma.done [#allocation4], 256
    $region21: #{tpu_custom_call.1} parent=1 // pred_fallthru
      _
    %42 = sfence
    %v43 = vld [vmem:[#allocation7] sm:$0xff]
    %v44 = vld [vmem:[#allocation7 + $0x8] sm:$0xff]
    %v47 = vcombine.high %v43, %v43
    %v48 = vcombine.high %v44, %v44
    %vm51 = vcmask 1043456
    %v52 = vsel %vm51, %v43, 0.0
    %v53 = vsel %vm51, %v47, 0.0
    %v54 = vadd.f32 %v52, %v53
    %55 = vadd.xlane.f32.xlu0 %v54
    %v56 = vpop.xlane.xlu0 %55
    %v57 = vsel %vm51, %v44, 0.0
    %v58 = vsel %vm51, %v48, 0.0
    %v59 = vadd.f32 %v57, %v58
    %60 = vadd.xlane.f32.xlu0 %v59
    %v61 = vpop.xlane.xlu0 %60
    %v64 = vrot.slane %v61, 7
    %vm65 = vcmask 1044484
    %v66 = vsel %vm65, %v64, %v56
    %v68 = vlaneseq
    %v69 = vand.u32 %v68, 127
    %v70 = vadd.s32 %v69, 4294967295
    %v71 = vlaneseq
    %v72 = vshrl.u32 %v71, 7
    %v73 = vsub.s32 %v70, %v72
    %v74 = vrot.slane %v56, %v73
    %v75 = vlaneseq
    %v76 = vshrl.u32 %v75, 7
    %v77 = vsub.s32 %v70, %v76
    %v78 = vrot.slane %v61, %v77
    %v79 = vsel %vm65, %v78, %v74
    %v81 = vrot.slane %v56, 5
    %v82 = vrot.slane %v61, 4
    %v83 = vsel %vm65, %v82, %v81
    %vm85 = vcmask 7168
    %v86 = vsel %vm85, %v66, %v79
    %vm87 = vcmask 39936
    %v88 = vsel %vm87, %v86, %v83
    %s89 = sld [smem:[#allocation3]]
    %v90 = vstv %s89
    %v91 = vmul.f32 %v90, %v88
    %s92 = sld [smem:[#allocation3 + $0x1]]
    %v93 = vstv %s92
    %v94 = vmul.f32 %v93, %v88
    %96 = vrot.lane.b32.xlu0 %v94, 127
    %v97 = vpop.permute.xlu0 %96
    %v99 = vadd.f32 %v91, %v97
    %s100 = sld [smem:[#allocation3 + $0x2]]
    %v101 = vstv %s100
    %v102 = vmul.f32 %v101, %v88
    %104 = vrot.lane.b32.xlu0 %v102, 126
    %v105 = vpop.permute.xlu0 %104
    %v107 = vadd.f32 %v99, %v105
    %v108 = vxor.u32 %v107, 2147483648
    %v109 = vmul.f32 %v108, 1.442695
    %v110 = vpow.pop %v109
    %v111 = vadd.f32 %v110, 1.0
    %v112 = vrcp.pop %v111
    %v113 = vmul.f32 1.0, %v112
    %s114 = sld [smem:[#allocation2]]
    %v115 = vstv %s114
    %v116 = vmul.f32 %v113, %v115
    %v117 = vlaneseq
    %v118 = vshrl.u32 %v117, 7
    %v119 = vsub.s32 3, %v118
    %v120 = vrot.slane %v116, %v119
    %122 = vbcast.lane.b32.xlu0 %v120, 256
    %v123 = vpop.permute.xlu0 %122
    %v124 = vlaneseq
    %v125 = vshrl.u32 %v124, 7
    %v126 = vsub.s32 4, %v125
    %v127 = vrot.slane %v116, %v126
    %129 = vbcast.lane.b32.xlu0 %v127, 256
    %v130 = vpop.permute.xlu0 %129
    %v134 = vunpack.c.l.s4 839922192
    %v135 = vunpack.c.0.s8 %v134
    %v136 = vlaneseq
    %v137 = vshrl.u32 %v136, 7
    %v138 = vsub.s32 %v135, %v137
    %v139 = vrot.slane %v123, %v138
    %v141 = vunpack.c.l.s4 839922192
    %v142 = vunpack.c.0.s8 %v141
    %v143 = vlaneseq
    %v144 = vshrl.u32 %v143, 7
    %v145 = vsub.s32 %v142, %v144
    %v146 = vrot.slane %v130, %v145
    %v149 = vmul.f32 %v43, %v139
    %v150 = vmul.f32 %v44, %v146
    %151 = vst [vmem:[#allocation8] sm:$0xff] %v149
    %152 = vst [vmem:[#allocation8 + $0x8] sm:$0xff] %v150
    // Predicated region
    $region22: #{tpu_custom_call.1} parent=1 // pred_check
      _
    $region23: #{tpu_custom_call.1} parent=1 // pred_check_branch
      %154 = sbr.rel (0) target = $region25
    $region24: #{tpu_custom_call.1} parent=1 // pred_region
      %s156 = ssub.s32 256, 256
      %157 = vsyncadd [#allocation5], %s156
      %s158 = sshll.u32 [#allocation8], 4
      %s159 = int_to_ptr.vmem [resolvable:$true] %s158
      %164 = dma.vmem_to_hbm [thread:$0]  %s159, 256, %s3, [#allocation5], 128, 128, 8
    $region25: #{tpu_custom_call.1} parent=1 // pred_fallthru
      _
    // Predicated region
    $region26: #{tpu_custom_call.1} parent=1 // pred_check
      _
    $region27: #{tpu_custom_call.1} parent=1 // pred_check_branch
      %166 = sbr.rel (0) target = $region29
    $region28: #{tpu_custom_call.1} parent=1 // pred_region
      %167 = dma.done [#allocation5], 256
    $region29: #{tpu_custom_call.1} parent=1 // pred_fallthru
      _
    %168 = vsyncpa [#allocation4], 1
    %169 = vsyncpa [#allocation5], 1
    %170 = vsyncpa [#allocation6], 1

</llo_original>
